<compile_context>
chip_gen: v6e
topology: v6e:2x2x1
jax: 0.10.0
libtpu: 0.0.40
codegen_flags: <defaults>
</compile_context>

<pallas_src>
import functools

import jax
import jax.numpy as jnp
from jax import lax
from jax.experimental import pallas as pl
from jax.experimental.pallas import tpu as pltpu


# ----------------------------- Pallas kernel ------------------------------- #

def _inverted_residual_kernel(*refs, H, W, expand, stride, use_res):
    """Fully fused InvertedResidual block for one image, layout (C, H*W)."""
    o_ref = refs[-1]
    it = iter(refs[:-1])
    x_ref = next(it)                      # (1, inp, H*W)
    if expand:
        w1_ref = next(it)                 # (hidden, inp)   folded expand weight
        b1_ref = next(it)                 # (hidden, 1)
    wdw_ref = next(it)                    # (hidden, 9)     folded dw taps, row-major (di,dj)
    bdw_ref = next(it)                    # (hidden, 1)
    w3_ref = next(it)                     # (oup, hidden)   folded project weight
    b3_ref = next(it)                     # (oup, 1)
    m_ref = next(it)                      # (9, H*W)        0/1 boundary masks per tap
    s_ref = next(it) if stride == 2 else None   # (H*W, Ho*Wo) stride-2 selection

    HW = H * W
    x = x_ref[0]                          # (inp, H*W), f32

    # ---- 1x1 expand conv + BN + ReLU6 (MXU) ----
    if expand:
        h = jnp.dot(w1_ref[...], x, preferred_element_type=jnp.float32)
        h = jnp.clip(h + b1_ref[...], 0.0, 6.0)
    else:
        h = x                             # hidden == inp

    # ---- 3x3 depthwise conv (stride 1, pad 1) via lane rolls + boundary masks ----
    # acc[c, p] = sum_{di,dj} w[c, tap] * h[c, p + di*W + dj] * valid(p, di, dj)
    acc = h * wdw_ref[:, 4:5]             # centre tap: mask is all ones
    for di in (-1, 0, 1):
        for dj in (-1, 0, 1):
            if di == 0 and dj == 0:
                continue
            k = (di + 1) * 3 + (dj + 1)
            off = di * W + dj
            # src[p] = h[p + off]; lanes that wrap around are exactly the masked ones.
            src = pltpu.roll(h, (-off) % HW, axis=1)
            acc = acc + (src * m_ref[k:k + 1, :]) * wdw_ref[:, k:k + 1]
    y = jnp.clip(acc + bdw_ref[...], 0.0, 6.0)       # folded BN shift + ReLU6

    # ---- in-kernel stride-2 subsample (exact: BN/ReLU6 are elementwise) ----
    if stride == 2:
        y = jnp.dot(y, s_ref[...], preferred_element_type=jnp.float32)

    # ---- 1x1 project conv + BN (+ residual, x already resident) ----
    out = jnp.dot(w3_ref[...], y, preferred_element_type=jnp.float32) + b3_ref[...]
    if use_res:
        out = out + x
    o_ref[0] = out.astype(o_ref.dtype)


# ------------------------------ wrapper / glue ------------------------------ #

def _fold_bn(gamma, beta, mean, var, eps=1e-5):
    scale = gamma / jnp.sqrt(var + eps)
    shift = beta - mean * scale
    return scale, shift


def inverted_residual_pallas(x_nchw, params, *, inp, oup, stride, expand_ratio):
    assert stride in (1, 2)
    hidden = round(inp * expand_ratio)
    use_res = stride == 1 and inp == oup
    expand = expand_ratio != 1
    N, C, H, W = x_nchw.shape
    assert C == inp
    HW = H * W
    Ho = (H - 1) // stride + 1
    Wo = (W - 1) // stride + 1

    # NCHW -> (N, C, H*W): a pure reshape (no transpose / data movement).
    x = x_nchw.reshape(N, C, HW).astype(jnp.float32)

    # Fold eval-mode BatchNorm into conv weights; lay weights out for the
    # channels-on-sublanes kernel layout.
    s2, sh2 = _fold_bn(**params["bn2"])
    wdw_t = (params["wdw"] * s2[None, None, :]).reshape(9, hidden).T    # (hidden, 9)
    bdw = sh2[:, None]                                                  # (hidden, 1)
    s3, sh3 = _fold_bn(**params["bn3"])
    w3_t = (params["w3"] * s3[None, :]).T                               # (oup, hidden)
    b3 = sh3[:, None]                                                   # (oup, 1)

    # 0/1 boundary masks for the 9 depthwise taps in flattened-spatial layout.
    ii, jj = jnp.meshgrid(jnp.arange(H), jnp.arange(W), indexing="ij")
    masks = jnp.stack([
        ((ii + di >= 0) & (ii + di < H) & (jj + dj >= 0) & (jj + dj < W))
        .astype(jnp.float32).reshape(HW)
        for di in (-1, 0, 1) for dj in (-1, 0, 1)
    ])                                                                  # (9, H*W)

    args = [x]
    in_specs = [pl.BlockSpec((1, inp, HW), lambda n: (n, 0, 0))]
    if expand:
        s1, sh1 = _fold_bn(**params["bn1"])
        w1_t = (params["w1"] * s1[None, :]).T                           # (hidden, inp)
        b1 = sh1[:, None]                                               # (hidden, 1)
        args += [w1_t, b1]
        in_specs += [pl.BlockSpec((hidden, inp), lambda n: (0, 0)),
                     pl.BlockSpec((hidden, 1), lambda n: (0, 0))]
    args += [wdw_t, bdw, w3_t, b3, masks]
    in_specs += [pl.BlockSpec((hidden, 9), lambda n: (0, 0)),
                 pl.BlockSpec((hidden, 1), lambda n: (0, 0)),
                 pl.BlockSpec((oup, hidden), lambda n: (0, 0)),
                 pl.BlockSpec((oup, 1), lambda n: (0, 0)),
                 pl.BlockSpec((9, HW), lambda n: (0, 0))]
    if stride == 2:
        # 0/1 selection matrix picking the (stride*io, stride*jo) positions of the
        # stride-1 depthwise output (exact for 3x3/pad-1 + elementwise BN/ReLU6).
        src = (stride * jnp.arange(Ho)[:, None] * W
               + stride * jnp.arange(Wo)[None, :]).reshape(-1)
        sel = jnp.zeros((HW, Ho * Wo), jnp.float32).at[src, jnp.arange(Ho * Wo)].set(1.0)
        args.append(sel)
        in_specs.append(pl.BlockSpec((HW, Ho * Wo), lambda n: (0, 0)))

    kernel = functools.partial(_inverted_residual_kernel, H=H, W=W,
                               expand=expand, stride=stride, use_res=use_res)

    out = pl.pallas_call(
        kernel,
        out_shape=jax.ShapeDtypeStruct((N, oup, Ho * Wo), jnp.float32),
        grid_spec=pltpu.PrefetchScalarGridSpec(
            num_scalar_prefetch=0,
            grid=(N,),                                   # batch-parallel (v7x: 2 TCs)
            in_specs=in_specs,
            out_specs=pl.BlockSpec((1, oup, Ho * Wo), lambda n: (n, 0, 0)),
        ),
        compiler_params=pltpu.CompilerParams(dimension_semantics=("parallel",)),
    )(*args)

    # (N, oup, Ho*Wo) -> NCHW: again a free reshape.
    return out.reshape(N, oup, Ho, Wo)


# ------------------------- deterministic parameters ------------------------- #

def init_params(key, inp, oup, expand_ratio):
    hidden = round(inp * expand_ratio)
    ks = jax.random.split(key, 8)

    def bn(k, c):
        k1, k2, k3, k4 = jax.random.split(k, 4)
        return dict(
            gamma=jax.random.uniform(k1, (c,), minval=0.5, maxval=1.5),
            beta=0.1 * jax.random.normal(k2, (c,)),
            mean=0.1 * jax.random.normal(k3, (c,)),
            var=jax.random.uniform(k4, (c,), minval=0.5, maxval=1.5),
        )

    p = {}
    if expand_ratio != 1:
        p["w1"] = jax.random.normal(ks[0], (inp, hidden)) / jnp.sqrt(inp)
        p["bn1"] = bn(ks[1], hidden)
    p["wdw"] = 0.2 * jax.random.normal(ks[2], (3, 3, hidden))
    p["bn2"] = bn(ks[3], hidden)
    p["w3"] = jax.random.normal(ks[4], (hidden, oup)) / jnp.sqrt(hidden)
    p["bn3"] = bn(ks[5], oup)
    return p


# ----------------------------- pure-JAX reference --------------------------- #

def _relu6(x):
    return jnp.clip(x, 0.0, 6.0)


def _bn_ref(x, p, eps=1e-5):
    return (x - p["mean"]) / jnp.sqrt(p["var"] + eps) * p["gamma"] + p["beta"]


def inverted_residual_ref(x_nchw, params, *, inp, oup, stride, expand_ratio):
    hidden = round(inp * expand_ratio)
    use_res = (stride == 1 and inp == oup)
    x = jnp.transpose(x_nchw, (0, 2, 3, 1)).astype(jnp.float32)
    h = x
    if expand_ratio != 1:
        h = jnp.einsum("nhwc,cd->nhwd", h, params["w1"],
                       precision=lax.Precision.HIGHEST)
        h = _relu6(_bn_ref(h, params["bn1"]))
    wdw = params["wdw"].reshape(3, 3, 1, hidden)                 # HWIO, I=1
    h = lax.conv_general_dilated(
        h, wdw, window_strides=(stride, stride), padding=((1, 1), (1, 1)),
        dimension_numbers=("NHWC", "HWIO", "NHWC"),
        feature_group_count=hidden, precision=lax.Precision.HIGHEST)
    h = _relu6(_bn_ref(h, params["bn2"]))
    h = jnp.einsum("nhwc,cd->nhwd", h, params["w3"],
                   precision=lax.Precision.HIGHEST)
    h = _bn_ref(h, params["bn3"])
    if use_res:
        h = h + x
    return jnp.transpose(h, (0, 3, 1, 2))


# ----------------------------------- main ----------------------------------- #

if __name__ == "__main__":
    key = jax.random.PRNGKey(0)
    kx, kp = jax.random.split(key)

    # PyTorch-convention NCHW input
    x = jax.random.normal(kx, (2, 8, 16, 16), jnp.float32)

    configs = [
        dict(inp=8, oup=8, stride=1, expand_ratio=3),    # expand + residual path
        dict(inp=8, oup=16, stride=2, expand_ratio=2),   # expand + stride-2 path
        dict(inp=8, oup=8, stride=1, expand_ratio=1),    # no-expand + residual path
    ]

    for i, cfg in enumerate(configs):
        params = init_params(jax.random.fold_in(kp, i), cfg["inp"], cfg["oup"],
                             cfg["expand_ratio"])
        out = inverted_residual_pallas(x, params, **cfg)
        out = jax.block_until_ready(out)
        ref = inverted_residual_ref(x, params, **cfg)
        assert out.shape == ref.shape, (out.shape, ref.shape)
        err = float(jnp.max(jnp.abs(out - ref)))
        assert err < 1e-2, f"config {cfg} mismatch, max abs err = {err}"

    print("KERNEL_OK")
</pallas_src>

<mosaic_0001>
module attributes {stable_mosaic.version = 11 : i64} {
  func.func @_inverted_residual_kernel(%arg0: i32, %arg1: memref<1x8x256xf32, #tpu.memory_space<vmem>>, %arg2: memref<24x8xf32, #tpu.memory_space<vmem>>, %arg3: memref<24x1xf32, #tpu.memory_space<vmem>>, %arg4: memref<24x9xf32, #tpu.memory_space<vmem>>, %arg5: memref<24x1xf32, #tpu.memory_space<vmem>>, %arg6: memref<8x24xf32, #tpu.memory_space<vmem>>, %arg7: memref<8x1xf32, #tpu.memory_space<vmem>>, %arg8: memref<9x256xf32, #tpu.memory_space<vmem>>, %arg9: memref<1x8x256xf32, #tpu.memory_space<vmem>>) attributes {dimension_semantics = [#tpu.dimension_semantics<parallel>], iteration_bounds = array<i64: 2>, scalar_prefetch = 0 : i64, scratch_operands = 0 : i64, tpu.core_type = #tpu.core_type<tc>, window_params = [{transform_indices = @transform_0, window_bounds = array<i64: 1, 8, 256>}, {pipeline_mode = #tpu.pipeline_mode<synchronous>, transform_indices = @transform_1, window_bounds = array<i64: 24, 8>}, {pipeline_mode = #tpu.pipeline_mode<synchronous>, transform_indices = @transform_2, window_bounds = array<i64: 24, 1>}, {pipeline_mode = #tpu.pipeline_mode<synchronous>, transform_indices = @transform_3, window_bounds = array<i64: 24, 9>}, {pipeline_mode = #tpu.pipeline_mode<synchronous>, transform_indices = @transform_4, window_bounds = array<i64: 24, 1>}, {pipeline_mode = #tpu.pipeline_mode<synchronous>, transform_indices = @transform_5, window_bounds = array<i64: 8, 24>}, {pipeline_mode = #tpu.pipeline_mode<synchronous>, transform_indices = @transform_6, window_bounds = array<i64: 8, 1>}, {pipeline_mode = #tpu.pipeline_mode<synchronous>, transform_indices = @transform_7, window_bounds = array<i64: 9, 256>}, {transform_indices = @transform_8, window_bounds = array<i64: 1, 8, 256>}]} {
    %c0 = arith.constant 0 : index
    %c0_0 = arith.constant 0 : index
    %c0_1 = arith.constant 0 : index
    %0 = vector.load %arg1[%c0, %c0_0, %c0_1] : memref<1x8x256xf32, #tpu.memory_space<vmem>>, vector<1x8x256xf32>
    %1 = vector.shape_cast %0 : vector<1x8x256xf32> to vector<8x256xf32>
    %c0_2 = arith.constant 0 : index
    %c0_3 = arith.constant 0 : index
    %2 = vector.load %arg2[%c0_2, %c0_3] : memref<24x8xf32, #tpu.memory_space<vmem>>, vector<24x8xf32>
    %cst = arith.constant dense<0.000000e+00> : vector<24x256xf32>
    %3 = tpu.matmul %2, %1, %cst {dimension_numbers = #tpu.dot_dimension_numbers<[1], [0], [0], [1], [0, 0, 1, 1], [], []>} : vector<24x8xf32>, vector<8x256xf32>, vector<24x256xf32> -> vector<24x256xf32>
    %c0_4 = arith.constant 0 : index
    %c0_5 = arith.constant 0 : index
    %4 = vector.load %arg3[%c0_4, %c0_5] : memref<24x1xf32, #tpu.memory_space<vmem>>, vector<24x1xf32>
    %5 = vector.broadcast %4 : vector<24x1xf32> to vector<24x256xf32>
    %6 = arith.addf %3, %5 : vector<24x256xf32>
    %cst_6 = arith.constant 0.000000e+00 : f32
    %cst_7 = arith.constant 6.000000e+00 : f32
    %7 = vector.broadcast %cst_6 : f32 to vector<24x256xf32>
    %8 = arith.maximumf %7, %6 : vector<24x256xf32>
    %9 = vector.broadcast %cst_7 : f32 to vector<24x256xf32>
    %10 = arith.minimumf %9, %8 : vector<24x256xf32>
    %c0_8 = arith.constant 0 : index
    %c4 = arith.constant 4 : index
    %11 = vector.load %arg4[%c0_8, %c4] : memref<24x9xf32, #tpu.memory_space<vmem>>, vector<24x1xf32>
    %12 = vector.broadcast %11 : vector<24x1xf32> to vector<24x256xf32>
    %13 = arith.mulf %10, %12 : vector<24x256xf32>
    %c17_i32 = arith.constant 17 : i32
    %14 = tpu.dynamic_rotate %10 by %c17_i32 dim 1 : vector<24x256xf32>, i32 -> vector<24x256xf32>
    %c0_9 = arith.constant 0 : index
    %c0_10 = arith.constant 0 : index
    %15 = vector.load %arg8[%c0_9, %c0_10] : memref<9x256xf32, #tpu.memory_space<vmem>>, vector<1x256xf32>
    %16 = vector.broadcast %15 : vector<1x256xf32> to vector<24x256xf32>
    %17 = arith.mulf %14, %16 : vector<24x256xf32>
    %c0_11 = arith.constant 0 : index
    %c0_12 = arith.constant 0 : index
    %18 = vector.load %arg4[%c0_11, %c0_12] : memref<24x9xf32, #tpu.memory_space<vmem>>, vector<24x1xf32>
    %19 = vector.broadcast %18 : vector<24x1xf32> to vector<24x256xf32>
    %20 = arith.mulf %17, %19 : vector<24x256xf32>
    %21 = arith.addf %13, %20 : vector<24x256xf32>
    %c16_i32 = arith.constant 16 : i32
    %22 = tpu.dynamic_rotate %10 by %c16_i32 dim 1 : vector<24x256xf32>, i32 -> vector<24x256xf32>
    %c1 = arith.constant 1 : index
    %c0_13 = arith.constant 0 : index
    %23 = vector.load %arg8[%c1, %c0_13] : memref<9x256xf32, #tpu.memory_space<vmem>>, vector<1x256xf32>
    %24 = vector.broadcast %23 : vector<1x256xf32> to vector<24x256xf32>
    %25 = arith.mulf %22, %24 : vector<24x256xf32>
    %c0_14 = arith.constant 0 : index
    %c1_15 = arith.constant 1 : index
    %26 = vector.load %arg4[%c0_14, %c1_15] : memref<24x9xf32, #tpu.memory_space<vmem>>, vector<24x1xf32>
    %27 = vector.broadcast %26 : vector<24x1xf32> to vector<24x256xf32>
    %28 = arith.mulf %25, %27 : vector<24x256xf32>
    %29 = arith.addf %21, %28 : vector<24x256xf32>
    %c15_i32 = arith.constant 15 : i32
    %30 = tpu.dynamic_rotate %10 by %c15_i32 dim 1 : vector<24x256xf32>, i32 -> vector<24x256xf32>
    %c2 = arith.constant 2 : index
    %c0_16 = arith.constant 0 : index
    %31 = vector.load %arg8[%c2, %c0_16] : memref<9x256xf32, #tpu.memory_space<vmem>>, vector<1x256xf32>
    %32 = vector.broadcast %31 : vector<1x256xf32> to vector<24x256xf32>
    %33 = arith.mulf %30, %32 : vector<24x256xf32>
    %c0_17 = arith.constant 0 : index
    %c2_18 = arith.constant 2 : index
    %34 = vector.load %arg4[%c0_17, %c2_18] : memref<24x9xf32, #tpu.memory_space<vmem>>, vector<24x1xf32>
    %35 = vector.broadcast %34 : vector<24x1xf32> to vector<24x256xf32>
    %36 = arith.mulf %33, %35 : vector<24x256xf32>
    %37 = arith.addf %29, %36 : vector<24x256xf32>
    %c1_i32 = arith.constant 1 : i32
    %38 = tpu.dynamic_rotate %10 by %c1_i32 dim 1 : vector<24x256xf32>, i32 -> vector<24x256xf32>
    %c3 = arith.constant 3 : index
    %c0_19 = arith.constant 0 : index
    %39 = vector.load %arg8[%c3, %c0_19] : memref<9x256xf32, #tpu.memory_space<vmem>>, vector<1x256xf32>
    %40 = vector.broadcast %39 : vector<1x256xf32> to vector<24x256xf32>
    %41 = arith.mulf %38, %40 : vector<24x256xf32>
    %c0_20 = arith.constant 0 : index
    %c3_21 = arith.constant 3 : index
    %42 = vector.load %arg4[%c0_20, %c3_21] : memref<24x9xf32, #tpu.memory_space<vmem>>, vector<24x1xf32>
    %43 = vector.broadcast %42 : vector<24x1xf32> to vector<24x256xf32>
    %44 = arith.mulf %41, %43 : vector<24x256xf32>
    %45 = arith.addf %37, %44 : vector<24x256xf32>
    %c255_i32 = arith.constant 255 : i32
    %46 = tpu.dynamic_rotate %10 by %c255_i32 dim 1 : vector<24x256xf32>, i32 -> vector<24x256xf32>
    %c5 = arith.constant 5 : index
    %c0_22 = arith.constant 0 : index
    %47 = vector.load %arg8[%c5, %c0_22] : memref<9x256xf32, #tpu.memory_space<vmem>>, vector<1x256xf32>
    %48 = vector.broadcast %47 : vector<1x256xf32> to vector<24x256xf32>
    %49 = arith.mulf %46, %48 : vector<24x256xf32>
    %c0_23 = arith.constant 0 : index
    %c5_24 = arith.constant 5 : index
    %50 = vector.load %arg4[%c0_23, %c5_24] : memref<24x9xf32, #tpu.memory_space<vmem>>, vector<24x1xf32>
    %51 = vector.broadcast %50 : vector<24x1xf32> to vector<24x256xf32>
    %52 = arith.mulf %49, %51 : vector<24x256xf32>
    %53 = arith.addf %45, %52 : vector<24x256xf32>
    %c241_i32 = arith.constant 241 : i32
    %54 = tpu.dynamic_rotate %10 by %c241_i32 dim 1 : vector<24x256xf32>, i32 -> vector<24x256xf32>
    %c6 = arith.constant 6 : index
    %c0_25 = arith.constant 0 : index
    %55 = vector.load %arg8[%c6, %c0_25] : memref<9x256xf32, #tpu.memory_space<vmem>>, vector<1x256xf32>
    %56 = vector.broadcast %55 : vector<1x256xf32> to vector<24x256xf32>
    %57 = arith.mulf %54, %56 : vector<24x256xf32>
    %c0_26 = arith.constant 0 : index
    %c6_27 = arith.constant 6 : index
    %58 = vector.load %arg4[%c0_26, %c6_27] : memref<24x9xf32, #tpu.memory_space<vmem>>, vector<24x1xf32>
    %59 = vector.broadcast %58 : vector<24x1xf32> to vector<24x256xf32>
    %60 = arith.mulf %57, %59 : vector<24x256xf32>
    %61 = arith.addf %53, %60 : vector<24x256xf32>
    %c240_i32 = arith.constant 240 : i32
    %62 = tpu.dynamic_rotate %10 by %c240_i32 dim 1 : vector<24x256xf32>, i32 -> vector<24x256xf32>
    %c7 = arith.constant 7 : index
    %c0_28 = arith.constant 0 : index
    %63 = vector.load %arg8[%c7, %c0_28] : memref<9x256xf32, #tpu.memory_space<vmem>>, vector<1x256xf32>
    %64 = vector.broadcast %63 : vector<1x256xf32> to vector<24x256xf32>
    %65 = arith.mulf %62, %64 : vector<24x256xf32>
    %c0_29 = arith.constant 0 : index
    %c7_30 = arith.constant 7 : index
    %66 = vector.load %arg4[%c0_29, %c7_30] : memref<24x9xf32, #tpu.memory_space<vmem>>, vector<24x1xf32>
    %67 = vector.broadcast %66 : vector<24x1xf32> to vector<24x256xf32>
    %68 = arith.mulf %65, %67 : vector<24x256xf32>
    %69 = arith.addf %61, %68 : vector<24x256xf32>
    %c239_i32 = arith.constant 239 : i32
    %70 = tpu.dynamic_rotate %10 by %c239_i32 dim 1 : vector<24x256xf32>, i32 -> vector<24x256xf32>
    %c8 = arith.constant 8 : index
    %c0_31 = arith.constant 0 : index
    %71 = vector.load %arg8[%c8, %c0_31] : memref<9x256xf32, #tpu.memory_space<vmem>>, vector<1x256xf32>
    %72 = vector.broadcast %71 : vector<1x256xf32> to vector<24x256xf32>
    %73 = arith.mulf %70, %72 : vector<24x256xf32>
    %c0_32 = arith.constant 0 : index
    %c8_33 = arith.constant 8 : index
    %74 = vector.load %arg4[%c0_32, %c8_33] : memref<24x9xf32, #tpu.memory_space<vmem>>, vector<24x1xf32>
    %75 = vector.broadcast %74 : vector<24x1xf32> to vector<24x256xf32>
    %76 = arith.mulf %73, %75 : vector<24x256xf32>
    %77 = arith.addf %69, %76 : vector<24x256xf32>
    %c0_34 = arith.constant 0 : index
    %c0_35 = arith.constant 0 : index
    %78 = vector.load %arg5[%c0_34, %c0_35] : memref<24x1xf32, #tpu.memory_space<vmem>>, vector<24x1xf32>
    %79 = vector.broadcast %78 : vector<24x1xf32> to vector<24x256xf32>
    %80 = arith.addf %77, %79 : vector<24x256xf32>
    %cst_36 = arith.constant 0.000000e+00 : f32
    %cst_37 = arith.constant 6.000000e+00 : f32
    %81 = vector.broadcast %cst_36 : f32 to vector<24x256xf32>
    %82 = arith.maximumf %81, %80 : vector<24x256xf32>
    %83 = vector.broadcast %cst_37 : f32 to vector<24x256xf32>
    %84 = arith.minimumf %83, %82 : vector<24x256xf32>
    %c0_38 = arith.constant 0 : index
    %c0_39 = arith.constant 0 : index
    %85 = vector.load %arg6[%c0_38, %c0_39] : memref<8x24xf32, #tpu.memory_space<vmem>>, vector<8x24xf32>
    %cst_40 = arith.constant dense<0.000000e+00> : vector<8x256xf32>
    %86 = tpu.matmul %85, %84, %cst_40 {dimension_numbers = #tpu.dot_dimension_numbers<[1], [0], [0], [1], [0, 0, 1, 1], [], []>} : vector<8x24xf32>, vector<24x256xf32>, vector<8x256xf32> -> vector<8x256xf32>
    %c0_41 = arith.constant 0 : index
    %c0_42 = arith.constant 0 : index
    %87 = vector.load %arg7[%c0_41, %c0_42] : memref<8x1xf32, #tpu.memory_space<vmem>>, vector<8x1xf32>
    %88 = vector.broadcast %87 : vector<8x1xf32> to vector<8x256xf32>
    %89 = arith.addf %86, %88 : vector<8x256xf32>
    %90 = arith.addf %89, %1 : vector<8x256xf32>
    %c0_43 = arith.constant 0 : index
    %c0_44 = arith.constant 0 : index
    %c0_45 = arith.constant 0 : index
    %91 = vector.load %arg9[%c0_43, %c0_44, %c0_45] : memref<1x8x256xf32, #tpu.memory_space<vmem>>, vector<1x8x256xf32>
    %92 = vector.shape_cast %91 : vector<1x8x256xf32> to vector<8x256xf32>
    %93 = vector.shape_cast %90 : vector<8x256xf32> to vector<1x8x256xf32>
    tpu.vector_store %arg9[%c0_43, %c0_44, %c0_45], %93 {strides = array<i32>} : memref<1x8x256xf32, #tpu.memory_space<vmem>>, vector<1x8x256xf32>,
    return
  }
  func.func @transform_0(%arg0: i32) -> (i32, i32, i32) {
    %c0_i32 = arith.constant 0 : i32
    %c0_i32_0 = arith.constant 0 : i32
    %c0_i32_1 = arith.constant 0 : i32
    return %arg0, %c0_i32, %c0_i32_0 : i32, i32, i32
  }
  func.func @transform_1(%arg0: i32) -> (i32, i32) {
    %c0_i32 = arith.constant 0 : i32
    %c0_i32_0 = arith.constant 0 : i32
    %c0_i32_1 = arith.constant 0 : i32
    return %c0_i32, %c0_i32_0 : i32, i32
  }
  func.func @transform_2(%arg0: i32) -> (i32, i32) {
    %c0_i32 = arith.constant 0 : i32
    %c0_i32_0 = arith.constant 0 : i32
    %c0_i32_1 = arith.constant 0 : i32
    return %c0_i32, %c0_i32_0 : i32, i32
  }
  func.func @transform_3(%arg0: i32) -> (i32, i32) {
    %c0_i32 = arith.constant 0 : i32
    %c0_i32_0 = arith.constant 0 : i32
    %c0_i32_1 = arith.constant 0 : i32
    return %c0_i32, %c0_i32_0 : i32, i32
  }
  func.func @transform_4(%arg0: i32) -> (i32, i32) {
    %c0_i32 = arith.constant 0 : i32
    %c0_i32_0 = arith.constant 0 : i32
    %c0_i32_1 = arith.constant 0 : i32
    return %c0_i32, %c0_i32_0 : i32, i32
  }
  func.func @transform_5(%arg0: i32) -> (i32, i32) {
    %c0_i32 = arith.constant 0 : i32
    %c0_i32_0 = arith.constant 0 : i32
    %c0_i32_1 = arith.constant 0 : i32
    return %c0_i32, %c0_i32_0 : i32, i32
  }
  func.func @transform_6(%arg0: i32) -> (i32, i32) {
    %c0_i32 = arith.constant 0 : i32
    %c0_i32_0 = arith.constant 0 : i32
    %c0_i32_1 = arith.constant 0 : i32
    return %c0_i32, %c0_i32_0 : i32, i32
  }
  func.func @transform_7(%arg0: i32) -> (i32, i32) {
    %c0_i32 = arith.constant 0 : i32
    %c0_i32_0 = arith.constant 0 : i32
    %c0_i32_1 = arith.constant 0 : i32
    return %c0_i32, %c0_i32_0 : i32, i32
  }
  func.func @transform_8(%arg0: i32) -> (i32, i32, i32) {
    %c0_i32 = arith.constant 0 : i32
    %c0_i32_0 = arith.constant 0 : i32
    %c0_i32_1 = arith.constant 0 : i32
    return %arg0, %c0_i32, %c0_i32_0 : i32, i32, i32
  }
}

</mosaic_0001>

<llo_original>
// kernel: tpu_custom_call.1
$region0: #{tpu_custom_call.1}
  #allocation0 [shape = 'u32[]', space=smem, size = 0x4, offset = 0x4, fixed_abs, tag = 'smem constant byte address 0x4 - core index']
  #allocation1 [shape = 'u32[144,128]{1,0:T(1,128)}', space=vmem, size = 0x12000, scoped, tag = 'internal scratch']
  %s0 = inlined_call_operand.vmem [shape: f32[2,8,256], index: 0, kind: input, shape index: {}]
  %s1 = inlined_call_operand.vmem [shape: f32[24,8], index: 1, kind: input, shape index: {}]
  %s2 = inlined_call_operand.vmem [shape: f32[24,1], index: 2, kind: input, shape index: {}]
  %s3 = inlined_call_operand.vmem [shape: f32[24,9], index: 3, kind: input, shape index: {}]
  %s4 = inlined_call_operand.vmem [shape: f32[24,1], index: 4, kind: input, shape index: {}]
  %s5 = inlined_call_operand.vmem [shape: f32[8,24], index: 5, kind: input, shape index: {}]
  %s6 = inlined_call_operand.vmem [shape: f32[8,1], index: 6, kind: input, shape index: {}]
  %s7 = inlined_call_operand.vmem [shape: f32[9,256], index: 7, kind: input, shape index: {}]
  %s8 = inlined_call_operand.hbm [shape: f32[2,8,256], index: 8, kind: output, shape index: {}]
  %s9 = sld [smem:[#allocation0]]
  $region65: #{tpu_custom_call.1} parent=0
    _
  %s11 = ssub.s32 1, %s9
  %s12 = scalar_select 0, %s11, %s9
  $region1: #{tpu_custom_call.1} parent=0
    #allocation2 [shape = 'u8[16384]{0}', space=vmem, size = 0x4000, scoped, tag = 'output window, operand 0']
    #allocation3 [shape = 's32[2]{0}', space=sflag, size = 0x8, scoped, tag = 'scoped memory for tpu_custom_call.1']
    %13 = vsyncpa [#allocation3], 0
    %s14 = scalar_lea.sflag [#allocation3], 1
    %15 = vsyncpa %s14, 0
    loop: start=0, step=1, limit=4
    $region2: #{tpu_custom_call.1} parent=1 // loop_pre_header
      _
    $region3: #{tpu_custom_call.1} parent=1 // loop_header
      %s17 = sphi 0, %s21
      %p18 = scmp.ge.s32.totalorder %s17, 4
      %s27 = sphi 0, %s29
      %s30 = sphi 0, %s27
      %s31 = sphi 0, %s30
      %s47 = sphi 0, %s31
      %s51 = sphi 0, %s51
      %s53 = sphi 0, %s51
      %s54 = sphi 0, %s53
      %s68 = sphi 0, %s54
      %s72 = sphi 0, %s72
      %s74 = sphi 0, %s72
      %s75 = sphi 0, %s74
      %s89 = sphi 0, %s75
      %s93 = sphi 0, %s93
      %s95 = sphi 0, %s93
      %s96 = sphi 0, %s95
      %s110 = sphi 0, %s96
      %s114 = sphi 0, %s114
      %s116 = sphi 0, %s114
      %s117 = sphi 0, %s116
      %s131 = sphi 0, %s117
      %s135 = sphi 0, %s135
      %s137 = sphi 0, %s135
      %s138 = sphi 0, %s137
      %s152 = sphi 0, %s138
      %s156 = sphi 0, %s156
      %s158 = sphi 0, %s156
      %s159 = sphi 0, %s158
      %s173 = sphi 0, %s159
      %s177 = sphi 0, %s177
      %s179 = sphi 0, %s177
      %s180 = sphi 0, %s179
      %s194 = sphi 0, %s180
      %s200 = sphi 0, %s202
      %s203 = sphi 0, %s200
      %s204 = sphi 0, %s203
      %s220 = sphi 0, %s204
    $region4: #{tpu_custom_call.1} parent=1 // loop_header_branch
      %20 = sbr.rel (%p18) target = $region8
    $region5: #{tpu_custom_call.1} parent=1 // loop_body
      %s22 = ssub.s32 %s17, 1
      %s23 = ssub.s32 %s17, 2
      %s24 = sadd.s32 %s17, 1
      %s25 = ssub.s32 %s17, %s24
      %p26 = scmp.eq.s32.totalorder %s25, 0
      %s28 = sadd.s32 %s27, 1
      %s29 = scalar_select %p26, %s27, %s28
      %p32 = pneg %p26
      %p33 = scmp.eq.s32.totalorder %s17, 1
      %p34 = por %p32, %p33
      %p35 = scmp.ne.s32.totalorder %s27, %s30
      %p36 = scmp.eq.s32.totalorder %s17, 0
      %p37 = por %p35, %p36
      %p38 = scmp.ne.s32.totalorder %s27, %s30
      %p39 = scmp.eq.s32.totalorder %s22, 1
      %p40 = por %p38, %p39
      %p41 = scmp.ne.s32.totalorder %s30, %s31
      %p42 = scmp.eq.s32.totalorder %s22, 0
      %p43 = por %p41, %p42
      %p44 = scmp.ne.s32.totalorder %s30, %s31
      %p45 = scmp.eq.s32.totalorder %s23, 1
      %p46 = por %p44, %p45
      %p48 = scmp.ne.s32.totalorder %s31, %s47
      %p49 = scmp.eq.s32.totalorder %s23, 0
      %p50 = por %p48, %p49
      %s52 = sadd.s32 %s51, 1
      %p55 = scmp.eq.s32.totalorder %s17, 1
      %p56 = scmp.ne.s32.totalorder %s51, %s53
      %p57 = scmp.eq.s32.totalorder %s17, 0
      %p58 = por %p56, %p57
      %p59 = scmp.ne.s32.totalorder %s51, %s53
      %p60 = scmp.eq.s32.totalorder %s22, 1
      %p61 = por %p59, %p60
      %p62 = scmp.ne.s32.totalorder %s53, %s54
      %p63 = scmp.eq.s32.totalorder %s22, 0
      %p64 = por %p62, %p63
      %p65 = scmp.ne.s32.totalorder %s53, %s54
      %p66 = scmp.eq.s32.totalorder %s23, 1
      %p67 = por %p65, %p66
      %p69 = scmp.ne.s32.totalorder %s54, %s68
      %p70 = scmp.eq.s32.totalorder %s23, 0
      %p71 = por %p69, %p70
      %s73 = sadd.s32 %s72, 1
      %p76 = scmp.eq.s32.totalorder %s17, 1
      %p77 = scmp.ne.s32.totalorder %s72, %s74
      %p78 = scmp.eq.s32.totalorder %s17, 0
      %p79 = por %p77, %p78
      %p80 = scmp.ne.s32.totalorder %s72, %s74
      %p81 = scmp.eq.s32.totalorder %s22, 1
      %p82 = por %p80, %p81
      %p83 = scmp.ne.s32.totalorder %s74, %s75
      %p84 = scmp.eq.s32.totalorder %s22, 0
      %p85 = por %p83, %p84
      %p86 = scmp.ne.s32.totalorder %s74, %s75
      %p87 = scmp.eq.s32.totalorder %s23, 1
      %p88 = por %p86, %p87
      %p90 = scmp.ne.s32.totalorder %s75, %s89
      %p91 = scmp.eq.s32.totalorder %s23, 0
      %p92 = por %p90, %p91
      %s94 = sadd.s32 %s93, 1
      %p97 = scmp.eq.s32.totalorder %s17, 1
      %p98 = scmp.ne.s32.totalorder %s93, %s95
      %p99 = scmp.eq.s32.totalorder %s17, 0
      %p100 = por %p98, %p99
      %p101 = scmp.ne.s32.totalorder %s93, %s95
      %p102 = scmp.eq.s32.totalorder %s22, 1
      %p103 = por %p101, %p102
      %p104 = scmp.ne.s32.totalorder %s95, %s96
      %p105 = scmp.eq.s32.totalorder %s22, 0
      %p106 = por %p104, %p105
      %p107 = scmp.ne.s32.totalorder %s95, %s96
      %p108 = scmp.eq.s32.totalorder %s23, 1
      %p109 = por %p107, %p108
      %p111 = scmp.ne.s32.totalorder %s96, %s110
      %p112 = scmp.eq.s32.totalorder %s23, 0
      %p113 = por %p111, %p112
      %s115 = sadd.s32 %s114, 1
      %p118 = scmp.eq.s32.totalorder %s17, 1
      %p119 = scmp.ne.s32.totalorder %s114, %s116
      %p120 = scmp.eq.s32.totalorder %s17, 0
      %p121 = por %p119, %p120
      %p122 = scmp.ne.s32.totalorder %s114, %s116
      %p123 = scmp.eq.s32.totalorder %s22, 1
      %p124 = por %p122, %p123
      %p125 = scmp.ne.s32.totalorder %s116, %s117
      %p126 = scmp.eq.s32.totalorder %s22, 0
      %p127 = por %p125, %p126
      %p128 = scmp.ne.s32.totalorder %s116, %s117
      %p129 = scmp.eq.s32.totalorder %s23, 1
      %p130 = por %p128, %p129
      %p132 = scmp.ne.s32.totalorder %s117, %s131
      %p133 = scmp.eq.s32.totalorder %s23, 0
      %p134 = por %p132, %p133
      %s136 = sadd.s32 %s135, 1
      %p139 = scmp.eq.s32.totalorder %s17, 1
      %p140 = scmp.ne.s32.totalorder %s135, %s137
      %p141 = scmp.eq.s32.totalorder %s17, 0
      %p142 = por %p140, %p141
      %p143 = scmp.ne.s32.totalorder %s135, %s137
      %p144 = scmp.eq.s32.totalorder %s22, 1
      %p145 = por %p143, %p144
      %p146 = scmp.ne.s32.totalorder %s137, %s138
      %p147 = scmp.eq.s32.totalorder %s22, 0
      %p148 = por %p146, %p147
      %p149 = scmp.ne.s32.totalorder %s137, %s138
      %p150 = scmp.eq.s32.totalorder %s23, 1
      %p151 = por %p149, %p150
      %p153 = scmp.ne.s32.totalorder %s138, %s152
      %p154 = scmp.eq.s32.totalorder %s23, 0
      %p155 = por %p153, %p154
      %s157 = sadd.s32 %s156, 1
      %p160 = scmp.eq.s32.totalorder %s17, 1
      %p161 = scmp.ne.s32.totalorder %s156, %s158
      %p162 = scmp.eq.s32.totalorder %s17, 0
      %p163 = por %p161, %p162
      %p164 = scmp.ne.s32.totalorder %s156, %s158
      %p165 = scmp.eq.s32.totalorder %s22, 1
      %p166 = por %p164, %p165
      %p167 = scmp.ne.s32.totalorder %s158, %s159
      %p168 = scmp.eq.s32.totalorder %s22, 0
      %p169 = por %p167, %p168
      %p170 = scmp.ne.s32.totalorder %s158, %s159
      %p171 = scmp.eq.s32.totalorder %s23, 1
      %p172 = por %p170, %p171
      %p174 = scmp.ne.s32.totalorder %s159, %s173
      %p175 = scmp.eq.s32.totalorder %s23, 0
      %p176 = por %p174, %p175
      %s178 = sadd.s32 %s177, 1
      %p181 = scmp.eq.s32.totalorder %s17, 1
      %p182 = scmp.ne.s32.totalorder %s177, %s179
      %p183 = scmp.eq.s32.totalorder %s17, 0
      %p184 = por %p182, %p183
      %p185 = scmp.ne.s32.totalorder %s177, %s179
      %p186 = scmp.eq.s32.totalorder %s22, 1
      %p187 = por %p185, %p186
      %p188 = scmp.ne.s32.totalorder %s179, %s180
      %p189 = scmp.eq.s32.totalorder %s22, 0
      %p190 = por %p188, %p189
      %p191 = scmp.ne.s32.totalorder %s179, %s180
      %p192 = scmp.eq.s32.totalorder %s23, 1
      %p193 = por %p191, %p192
      %p195 = scmp.ne.s32.totalorder %s180, %s194
      %p196 = scmp.eq.s32.totalorder %s23, 0
      %p197 = por %p195, %p196
      %s198 = ssub.s32 %s17, %s24
      %p199 = scmp.eq.s32.totalorder %s198, 0
      %s201 = sadd.s32 %s200, 1
      %s202 = scalar_select %p199, %s200, %s201
      %p205 = pneg %p199
      %p206 = scmp.eq.s32.totalorder %s17, 1
      %p207 = por %p205, %p206
      %p208 = scmp.ne.s32.totalorder %s200, %s203
      %p209 = scmp.eq.s32.totalorder %s17, 0
      %p210 = por %p208, %p209
      %p211 = scmp.ne.s32.totalorder %s200, %s203
      %p212 = scmp.eq.s32.totalorder %s22, 1
      %p213 = por %p211, %p212
      %p214 = scmp.ne.s32.totalorder %s203, %s204
      %p215 = scmp.eq.s32.totalorder %s22, 0
      %p216 = por %p214, %p215
      %p217 = scmp.ne.s32.totalorder %s203, %s204
      %p218 = scmp.eq.s32.totalorder %s23, 1
      %p219 = por %p217, %p218
      %p221 = scmp.ne.s32.totalorder %s204, %s220
      %p222 = scmp.eq.s32.totalorder %s23, 0
      %p223 = por %p221, %p222
      %p224 = scmp.le.s32.totalorder 1, %s17
      %p225 = scmp.lt.s32.totalorder %s17, 3
      %p226 = pnand %p224, %p225
      %p227 = pneg %p226
      // Predicated region
      $region9: #{tpu_custom_call.1} parent=5 // pred_check
        _
      $region10: #{tpu_custom_call.1} parent=5 // pred_check_branch
        %229 = sbr.rel (%p226) target = $region12
      $region11: #{tpu_custom_call.1} parent=5 // pred_region
        %s230 = ssub.s32 %s17, 1
        // Predicated region
        $region13: #{tpu_custom_call.1} parent=11 // pred_check
          %p231 = pneg %p64
        $region14: #{tpu_custom_call.1} parent=11 // pred_check_branch
          %233 = sbr.rel (%p231) target = $region16
        $region15: #{tpu_custom_call.1} parent=11 // pred_region
          _
        $region16: #{tpu_custom_call.1} parent=11 // pred_fallthru
          _
        // Predicated region
        $region17: #{tpu_custom_call.1} parent=11 // pred_check
          %p234 = pneg %p85
        $region18: #{tpu_custom_call.1} parent=11 // pred_check_branch
          %236 = sbr.rel (%p234) target = $region20
        $region19: #{tpu_custom_call.1} parent=11 // pred_region
          _
        $region20: #{tpu_custom_call.1} parent=11 // pred_fallthru
          _
        // Predicated region
        $region21: #{tpu_custom_call.1} parent=11 // pred_check
          %p237 = pneg %p106
        $region22: #{tpu_custom_call.1} parent=11 // pred_check_branch
          %239 = sbr.rel (%p237) target = $region24
        $region23: #{tpu_custom_call.1} parent=11 // pred_region
          _
        $region24: #{tpu_custom_call.1} parent=11 // pred_fallthru
          _
        // Predicated region
        $region25: #{tpu_custom_call.1} parent=11 // pred_check
          %p240 = pneg %p127
        $region26: #{tpu_custom_call.1} parent=11 // pred_check_branch
          %242 = sbr.rel (%p240) target = $region28
        $region27: #{tpu_custom_call.1} parent=11 // pred_region
          _
        $region28: #{tpu_custom_call.1} parent=11 // pred_fallthru
          _
        // Predicated region
        $region29: #{tpu_custom_call.1} parent=11 // pred_check
          %p243 = pneg %p148
        $region30: #{tpu_custom_call.1} parent=11 // pred_check_branch
          %245 = sbr.rel (%p243) target = $region32
        $region31: #{tpu_custom_call.1} parent=11 // pred_region
          _
        $region32: #{tpu_custom_call.1} parent=11 // pred_fallthru
          _
        // Predicated region
        $region33: #{tpu_custom_call.1} parent=11 // pred_check
          %p246 = pneg %p169
        $region34: #{tpu_custom_call.1} parent=11 // pred_check_branch
          %248 = sbr.rel (%p246) target = $region36
        $region35: #{tpu_custom_call.1} parent=11 // pred_region
          _
        $region36: #{tpu_custom_call.1} parent=11 // pred_fallthru
          _
        // Predicated region
        $region37: #{tpu_custom_call.1} parent=11 // pred_check
          %p249 = pneg %p190
        $region38: #{tpu_custom_call.1} parent=11 // pred_check_branch
          %251 = sbr.rel (%p249) target = $region40
        $region39: #{tpu_custom_call.1} parent=11 // pred_region
          _
        $region40: #{tpu_custom_call.1} parent=11 // pred_fallthru
          _
      $region12: #{tpu_custom_call.1} parent=5 // pred_fallthru
        _
      %p252 = scmp.lt.s32.totalorder %s17, 2
      // Predicated region
      $region41: #{tpu_custom_call.1} parent=5 // pred_check
        %p253 = pneg %p252
      $region42: #{tpu_custom_call.1} parent=5 // pred_check_branch
        %255 = sbr.rel (%p253) target = $region44
      $region43: #{tpu_custom_call.1} parent=5 // pred_region
        // Predicated region
        $region45: #{tpu_custom_call.1} parent=43 // pred_check
          %p256 = pneg %p37
        $region46: #{tpu_custom_call.1} parent=43 // pred_check_branch
          %258 = sbr.rel (%p256) target = $region48
        $region47: #{tpu_custom_call.1} parent=43 // pred_region
          %p259 = scmp.lt.s32.totalorder %s17, 1
          %s260 = scalar_select %p259, %s17, 1
          %s261 = smul.addr %s260, 2
          %s262 = smul.addr %s261, 8
          %s263 = scalar_lea.vmem %s0, %s262
        $region48: #{tpu_custom_call.1} parent=43 // pred_fallthru
          _
      $region44: #{tpu_custom_call.1} parent=5 // pred_fallthru
        _
      %p264 = scmp.le.s32.totalorder 1, %s17
      %p265 = scmp.lt.s32.totalorder %s17, 3
      %p266 = pnand %p264, %p265
      %p267 = pneg %p266
      // Predicated region
      $region49: #{tpu_custom_call.1} parent=5 // pred_check
        _
      $region50: #{tpu_custom_call.1} parent=5 // pred_check_branch
        %269 = sbr.rel (%p266) target = $region52
      $region51: #{tpu_custom_call.1} parent=5 // pred_region
        %s270 = ssub.s32 %s17, 1
        %p271 = scmp.lt.s32.totalorder %s22, 1
        %s272 = scalar_select %p271, %s22, 1
        %s273 = smul.addr %s272, 2
        %s274 = smul.addr %s273, 8
        %s275 = scalar_lea.vmem %s0, %s274
        %p276 = pneg %p43
        %p277 = pneg %p40
        %p278 = pneg %p64
        %p279 = pneg %p61
        %p280 = pneg %p85
        %p281 = pneg %p82
        %p282 = pneg %p106
        %p283 = pneg %p103
        %p284 = pneg %p127
        %p285 = pneg %p124
        %p286 = pneg %p148
        %p287 = pneg %p145
        %p288 = pneg %p169
        %p289 = pneg %p166
        %p290 = pneg %p190
        %p291 = pneg %p187
        %p292 = pneg %p216
        %p293 = pneg %p213
        %s294 = sand.u32 %s203, 1
        %s295 = scalar_lea.sflag [#allocation3], %s294
        %s296 = sand.u32 %s203, 1
        %s297 = smul.addr %s296, 16
        %s298 = scalar_lea.vmem [#allocation2], %s297
        %p299 = scmp.lt.s32.totalorder %s22, 1
        %s300 = scalar_select %p299, %s22, 1
        %s301 = smul.addr %s300, 2
        %s302 = smul.addr %s301, 8
        %s303 = scalar_lea.vmem %s0, %s302
        %v304 = vld [vmem:[%s303] sm:$0xff]
        %v305 = vld [vmem:[%s303 + $0x8] sm:$0xff]
        %v306 = vld [vmem:[%s1] sm:$0xff]
        %v307 = vld [vmem:[%s1 + $0x8] sm:$0xff]
        %v308 = vld [vmem:[%s1 + $0x10] sm:$0xff]
        %v309 = vld [vmem:[%s2] sm:$0xff]
        %v310 = vld [vmem:[%s2 + $0x8] sm:$0xff]
        %v311 = vld [vmem:[%s2 + $0x10] sm:$0xff]
        %313 = vset.pattern.permute.xlu0 0
        %314 = vperm.xlu0 %313, %v309
        %v315 = vpop.permute.xlu0 %314
        %318 = vset.pattern.permute.xlu0 0
        %319 = vperm.xlu0 %318, %v310
        %v320 = vpop.permute.xlu0 %319
        %323 = vset.pattern.permute.xlu0 0
        %324 = vperm.xlu0 %323, %v311
        %v325 = vpop.permute.xlu0 %324
        %vm327 = vcmask 64512
        %v329 = vsel %vm327, %v306, 0
        %v332 = vsel %vm327, %v307, 0
        %v335 = vsel %vm327, %v308, 0
        %337 = vmatprep.subr.mxu0 0.0
        %338 = vmatpush1.msra.mxu0 0.0
        %339 = vmatprep.subr.mxu0 0.0
        %340 = vmatpush1.msra.mxu0 0.0
        %341 = vmatprep.subr.mxu0 0.0
        %342 = vmatpush1.msra.mxu0 0.0
        %343 = vmatprep.subr.mxu0 0.0
        %344 = vmatpush1.msra.mxu0 0.0
        %345 = vmatprep.subr.mxu0 0.0
        %346 = vmatpush1.msra.mxu0 0.0
        %347 = vmatprep.subr.mxu0 0.0
        %348 = vmatpush1.msra.mxu0 0.0
        %349 = vmatprep.subr.mxu0 0.0
        %350 = vmatpush1.msra.mxu0 0.0
        %351 = vmatprep.subr.mxu0 0.0
        %352 = vmatpush1.msra.mxu0 0.0
        %353 = vmatprep.subr.mxu0 0.0
        %354 = vmatpush1.msra.mxu0 0.0
        %355 = vmatprep.subr.mxu0 0.0
        %356 = vmatpush1.msra.mxu0 0.0
        %357 = vmatprep.subr.mxu0 0.0
        %358 = vmatpush1.msra.mxu0 0.0
        %359 = vmatprep.subr.mxu0 0.0
        %360 = vmatpush1.msra.mxu0 0.0
        %361 = vmatprep.subr.mxu0 0.0
        %362 = vmatpush1.msra.mxu0 0.0
        %363 = vmatprep.subr.mxu0 0.0
        %364 = vmatpush1.msra.mxu0 0.0
        %365 = vmatprep.subr.mxu0 0.0
        %366 = vmatpush1.msra.mxu0 0.0
        %367 = vmatprep.subr.mxu0 %v305
        %368 = vmatpush1.msra.mxu0 %v304
        %369 = vmatprep.subr.mxu0 0.0
        %370 = vmatpush2.msra.mxu0 0.0
        %371 = vmatprep.subr.mxu0 0.0
        %372 = vmatpush2.msra.mxu0 0.0
        %373 = vmatprep.subr.mxu0 0.0
        %374 = vmatpush2.msra.mxu0 0.0
        %375 = vmatprep.subr.mxu0 0.0
        %376 = vmatpush2.msra.mxu0 0.0
        %377 = vmatprep.subr.mxu0 0.0
        %378 = vmatpush2.msra.mxu0 0.0
        %379 = vmatprep.subr.mxu0 0.0
        %380 = vmatpush2.msra.mxu0 0.0
        %381 = vmatprep.subr.mxu0 0.0
        %382 = vmatpush2.msra.mxu0 0.0
        %383 = vmatprep.subr.mxu0 0.0
        %384 = vmatpush2.msra.mxu0 0.0
        %385 = vmatprep.subr.mxu0 0.0
        %386 = vmatpush2.msra.mxu0 0.0
        %387 = vmatprep.subr.mxu0 0.0
        %388 = vmatpush2.msra.mxu0 0.0
        %389 = vmatprep.subr.mxu0 0.0
        %390 = vmatpush2.msra.mxu0 0.0
        %391 = vmatprep.subr.mxu0 0.0
        %392 = vmatpush2.msra.mxu0 0.0
        %393 = vmatprep.subr.mxu0 0.0
        %394 = vmatpush2.msra.mxu0 0.0
        %395 = vmatprep.subr.mxu0 0.0
        %396 = vmatpush2.msra.mxu0 0.0
        %397 = vmatprep.subr.mxu0 0.0
        %398 = vmatpush2.msra.mxu0 0.0
        %399 = vmatprep.subr.mxu0 0.0
        %400 = vmatpush2.msra.mxu0 0.0
        %401 = vmatprep.mubr.f32.mxu0 0.0
        %402 = vmatmul.mubr.f32.gmra.mxu0 %v329
        %v403 = vpop.f32.mrf.mxu0
        %v404 = vadd.f32 %v315, %v403
        %v405 = vpop.f32.mrf.mxu0
        %v406 = vadd.f32 %v315, %v405
        %407 = vmatprep.mubr.f32.mxu0 0.0
        %408 = vmatmul.mubr.f32.gmra.mxu0 %v332
        %v409 = vpop.f32.mrf.mxu0
        %v410 = vadd.f32 %v320, %v409
        %v411 = vpop.f32.mrf.mxu0
        %v412 = vadd.f32 %v320, %v411
        %413 = vmatprep.mubr.f32.mxu0 0.0
        %414 = vmatmul.mubr.f32.gmra.mxu0 %v335
        %v415 = vpop.f32.mrf.mxu0
        %v416 = vadd.f32 %v325, %v415
        %v417 = vpop.f32.mrf.mxu0
        %v418 = vadd.f32 %v325, %v417
        %419 = vdwg.mxu0
        %v420 = vmax.f32 %v404, 0.0
        %v421 = vmax.f32 %v406, 0.0
        %v422 = vmax.f32 %v410, 0.0
        %v423 = vmax.f32 %v412, 0.0
        %v424 = vmax.f32 %v416, 0.0
        %v425 = vmax.f32 %v418, 0.0
        %v426 = vmin.f32 %v420, 6.0
        %v427 = vmin.f32 %v421, 6.0
        %v428 = vmin.f32 %v422, 6.0
        %v429 = vmin.f32 %v423, 6.0
        %v430 = vmin.f32 %v424, 6.0
        %v431 = vmin.f32 %v425, 6.0
        %v432 = vld [vmem:[%s3] sm:$0xff]
        %v433 = vld [vmem:[%s3 + $0x8] sm:$0xff]
        %v434 = vld [vmem:[%s3 + $0x10] sm:$0xff]
        %436 = vset.pattern.permute.xlu0 4
        %437 = vperm.xlu0 %436, %v432
        %v438 = vpop.permute.xlu0 %437
        %441 = vset.pattern.permute.xlu0 4
        %442 = vperm.xlu0 %441, %v433
        %v443 = vpop.permute.xlu0 %442
        %446 = vset.pattern.permute.xlu0 4
        %447 = vperm.xlu0 %446, %v434
        %v448 = vpop.permute.xlu0 %447
        %v450 = vmul.f32 %v426, %v438
        %v451 = vmul.f32 %v427, %v438
        %v452 = vmul.f32 %v428, %v443
        %v453 = vmul.f32 %v429, %v443
        %v454 = vmul.f32 %v430, %v448
        %v455 = vmul.f32 %v431, %v448
        %456 = vrot.lane.b32.xlu0 %v426, 17
        %v457 = vpop.permute.xlu0 %456
        %458 = vrot.lane.b32.xlu0 %v428, 17
        %v459 = vpop.permute.xlu0 %458
        %460 = vrot.lane.b32.xlu0 %v430, 17
        %v461 = vpop.permute.xlu0 %460
        %462 = vrot.lane.b32.xlu0 %v427, 17
        %v463 = vpop.permute.xlu0 %462
        %464 = vrot.lane.b32.xlu0 %v429, 17
        %v465 = vpop.permute.xlu0 %464
        %466 = vrot.lane.b32.xlu0 %v431, 17
        %v467 = vpop.permute.xlu0 %466
        %v468 = vlaneseq
        %v469 = vand.u32 %v468, 127
        %vm470 = vcmp.lt.s32.totalorder %v469, 17
        %v471 = vsel %vm470, %v457, %v463
        %v472 = vsel %vm470, %v459, %v465
        %v473 = vsel %vm470, %v461, %v467
        %v474 = vsel %vm470, %v463, %v457
        %v475 = vsel %vm470, %v465, %v459
        %v476 = vsel %vm470, %v467, %v461
        %v477 = vld [vmem:[%s7] ss:$8 sm:$0x3]
        %v479 = vlaneseq
        %v480 = vshrl.u32 %v479, 7
        %v481 = vsub.s32 0, %v480
        %v482 = vrot.slane %v477, %v481
        %v483 = vlaneseq
        %v484 = vshrl.u32 %v483, 7
        %v485 = vsub.s32 1, %v484
        %v486 = vrot.slane %v477, %v485
        %v489 = vmul.f32 %v474, %v482
        %v490 = vmul.f32 %v471, %v486
        %v491 = vmul.f32 %v475, %v482
        %v492 = vmul.f32 %v472, %v486
        %v493 = vmul.f32 %v476, %v482
        %v494 = vmul.f32 %v473, %v486
        %495 = vset.pattern.permute.xlu0 0
        %496 = vperm.xlu0 %495, %v432
        %v497 = vpop.permute.xlu0 %496
        %499 = vset.pattern.permute.xlu0 0
        %500 = vperm.xlu0 %499, %v433
        %v501 = vpop.permute.xlu0 %500
        %503 = vset.pattern.permute.xlu0 0
        %504 = vperm.xlu0 %503, %v434
        %v505 = vpop.permute.xlu0 %504
        %v507 = vmul.f32 %v489, %v497
        %v508 = vmul.f32 %v490, %v497
        %v509 = vmul.f32 %v491, %v501
        %v510 = vmul.f32 %v492, %v501
        %v511 = vmul.f32 %v493, %v505
        %v512 = vmul.f32 %v494, %v505
        %v513 = vadd.f32 %v450, %v507
        %v514 = vadd.f32 %v451, %v508
        %v515 = vadd.f32 %v452, %v509
        %v516 = vadd.f32 %v453, %v510
        %v517 = vadd.f32 %v454, %v511
        %v518 = vadd.f32 %v455, %v512
        %519 = vrot.lane.b32.xlu0 %v426, 16
        %v520 = vpop.permute.xlu0 %519
        %521 = vrot.lane.b32.xlu0 %v428, 16
        %v522 = vpop.permute.xlu0 %521
        %523 = vrot.lane.b32.xlu0 %v430, 16
        %v524 = vpop.permute.xlu0 %523
        %525 = vrot.lane.b32.xlu0 %v427, 16
        %v526 = vpop.permute.xlu0 %525
        %527 = vrot.lane.b32.xlu0 %v429, 16
        %v528 = vpop.permute.xlu0 %527
        %529 = vrot.lane.b32.xlu0 %v431, 16
        %v530 = vpop.permute.xlu0 %529
        %vm531 = vcmp.lt.s32.totalorder %v469, 16
        %v532 = vsel %vm531, %v520, %v526
        %v533 = vsel %vm531, %v522, %v528
        %v534 = vsel %vm531, %v524, %v530
        %v535 = vsel %vm531, %v526, %v520
        %v536 = vsel %vm531, %v528, %v522
        %v537 = vsel %vm531, %v530, %v524
        %s538 = scalar_lea.vmem %s7, 1
        %v539 = vld [vmem:[%s538] ss:$8 sm:$0x3]
        %v541 = vlaneseq
        %v542 = vshrl.u32 %v541, 7
        %v543 = vsub.s32 0, %v542
        %v544 = vrot.slane %v539, %v543
        %v545 = vlaneseq
        %v546 = vshrl.u32 %v545, 7
        %v547 = vsub.s32 1, %v546
        %v548 = vrot.slane %v539, %v547
        %v551 = vmul.f32 %v535, %v544
        %v552 = vmul.f32 %v532, %v548
        %v553 = vmul.f32 %v536, %v544
        %v554 = vmul.f32 %v533, %v548
        %v555 = vmul.f32 %v537, %v544
        %v556 = vmul.f32 %v534, %v548
        %557 = vset.pattern.permute.xlu0 1
        %558 = vperm.xlu0 %557, %v432
        %v559 = vpop.permute.xlu0 %558
        %561 = vset.pattern.permute.xlu0 1
        %562 = vperm.xlu0 %561, %v433
        %v563 = vpop.permute.xlu0 %562
        %565 = vset.pattern.permute.xlu0 1
        %566 = vperm.xlu0 %565, %v434
        %v567 = vpop.permute.xlu0 %566
        %v569 = vmul.f32 %v551, %v559
        %v570 = vmul.f32 %v552, %v559
        %v571 = vmul.f32 %v553, %v563
        %v572 = vmul.f32 %v554, %v563
        %v573 = vmul.f32 %v555, %v567
        %v574 = vmul.f32 %v556, %v567
        %v575 = vadd.f32 %v513, %v569
        %v576 = vadd.f32 %v514, %v570
        %v577 = vadd.f32 %v515, %v571
        %v578 = vadd.f32 %v516, %v572
        %v579 = vadd.f32 %v517, %v573
        %v580 = vadd.f32 %v518, %v574
        %581 = vrot.lane.b32.xlu0 %v426, 15
        %v582 = vpop.permute.xlu0 %581
        %583 = vrot.lane.b32.xlu0 %v428, 15
        %v584 = vpop.permute.xlu0 %583
        %585 = vrot.lane.b32.xlu0 %v430, 15
        %v586 = vpop.permute.xlu0 %585
        %587 = vrot.lane.b32.xlu0 %v427, 15
        %v588 = vpop.permute.xlu0 %587
        %589 = vrot.lane.b32.xlu0 %v429, 15
        %v590 = vpop.permute.xlu0 %589
        %591 = vrot.lane.b32.xlu0 %v431, 15
        %v592 = vpop.permute.xlu0 %591
        %vm593 = vcmp.lt.s32.totalorder %v469, 15
        %v594 = vsel %vm593, %v582, %v588
        %v595 = vsel %vm593, %v584, %v590
        %v596 = vsel %vm593, %v586, %v592
        %v597 = vsel %vm593, %v588, %v582
        %v598 = vsel %vm593, %v590, %v584
        %v599 = vsel %vm593, %v592, %v586
        %s600 = scalar_lea.vmem %s7, 2
        %v601 = vld [vmem:[%s600] ss:$8 sm:$0x3]
        %v603 = vlaneseq
        %v604 = vshrl.u32 %v603, 7
        %v605 = vsub.s32 0, %v604
        %v606 = vrot.slane %v601, %v605
        %v607 = vlaneseq
        %v608 = vshrl.u32 %v607, 7
        %v609 = vsub.s32 1, %v608
        %v610 = vrot.slane %v601, %v609
        %v613 = vmul.f32 %v597, %v606
        %v614 = vmul.f32 %v594, %v610
        %v615 = vmul.f32 %v598, %v606
        %v616 = vmul.f32 %v595, %v610
        %v617 = vmul.f32 %v599, %v606
        %v618 = vmul.f32 %v596, %v610
        %619 = vset.pattern.permute.xlu0 2
        %620 = vperm.xlu0 %619, %v432
        %v621 = vpop.permute.xlu0 %620
        %623 = vset.pattern.permute.xlu0 2
        %624 = vperm.xlu0 %623, %v433
        %v625 = vpop.permute.xlu0 %624
        %627 = vset.pattern.permute.xlu0 2
        %628 = vperm.xlu0 %627, %v434
        %v629 = vpop.permute.xlu0 %628
        %v631 = vmul.f32 %v613, %v621
        %v632 = vmul.f32 %v614, %v621
        %v633 = vmul.f32 %v615, %v625
        %v634 = vmul.f32 %v616, %v625
        %v635 = vmul.f32 %v617, %v629
        %v636 = vmul.f32 %v618, %v629
        %v637 = vadd.f32 %v575, %v631
        %v638 = vadd.f32 %v576, %v632
        %v639 = vadd.f32 %v577, %v633
        %v640 = vadd.f32 %v578, %v634
        %v641 = vadd.f32 %v579, %v635
        %v642 = vadd.f32 %v580, %v636
        %643 = vrot.lane.b32.xlu0 %v426, 1
        %v644 = vpop.permute.xlu0 %643
        %645 = vrot.lane.b32.xlu0 %v428, 1
        %v646 = vpop.permute.xlu0 %645
        %647 = vrot.lane.b32.xlu0 %v430, 1
        %v648 = vpop.permute.xlu0 %647
        %649 = vrot.lane.b32.xlu0 %v427, 1
        %v650 = vpop.permute.xlu0 %649
        %651 = vrot.lane.b32.xlu0 %v429, 1
        %v652 = vpop.permute.xlu0 %651
        %653 = vrot.lane.b32.xlu0 %v431, 1
        %v654 = vpop.permute.xlu0 %653
        %vm655 = vcmp.lt.s32.totalorder %v469, 1
        %v656 = vsel %vm655, %v644, %v650
        %v657 = vsel %vm655, %v646, %v652
        %v658 = vsel %vm655, %v648, %v654
        %v659 = vsel %vm655, %v650, %v644
        %v660 = vsel %vm655, %v652, %v646
        %v661 = vsel %vm655, %v654, %v648
        %s662 = scalar_lea.vmem %s7, 3
        %v663 = vld [vmem:[%s662] ss:$8 sm:$0x3]
        %v665 = vlaneseq
        %v666 = vshrl.u32 %v665, 7
        %v667 = vsub.s32 0, %v666
        %v668 = vrot.slane %v663, %v667
        %v669 = vlaneseq
        %v670 = vshrl.u32 %v669, 7
        %v671 = vsub.s32 1, %v670
        %v672 = vrot.slane %v663, %v671
        %v675 = vmul.f32 %v659, %v668
        %v676 = vmul.f32 %v656, %v672
        %v677 = vmul.f32 %v660, %v668
        %v678 = vmul.f32 %v657, %v672
        %v679 = vmul.f32 %v661, %v668
        %v680 = vmul.f32 %v658, %v672
        %681 = vset.pattern.permute.xlu0 3
        %682 = vperm.xlu0 %681, %v432
        %v683 = vpop.permute.xlu0 %682
        %685 = vset.pattern.permute.xlu0 3
        %686 = vperm.xlu0 %685, %v433
        %v687 = vpop.permute.xlu0 %686
        %689 = vset.pattern.permute.xlu0 3
        %690 = vperm.xlu0 %689, %v434
        %v691 = vpop.permute.xlu0 %690
        %v693 = vmul.f32 %v675, %v683
        %v694 = vmul.f32 %v676, %v683
        %v695 = vmul.f32 %v677, %v687
        %v696 = vmul.f32 %v678, %v687
        %v697 = vmul.f32 %v679, %v691
        %v698 = vmul.f32 %v680, %v691
        %v699 = vadd.f32 %v637, %v693
        %v700 = vadd.f32 %v638, %v694
        %v701 = vadd.f32 %v639, %v695
        %v702 = vadd.f32 %v640, %v696
        %v703 = vadd.f32 %v641, %v697
        %v704 = vadd.f32 %v642, %v698
        %705 = vrot.lane.b32.xlu0 %v426, 127
        %v706 = vpop.permute.xlu0 %705
        %707 = vrot.lane.b32.xlu0 %v428, 127
        %v708 = vpop.permute.xlu0 %707
        %709 = vrot.lane.b32.xlu0 %v430, 127
        %v710 = vpop.permute.xlu0 %709
        %711 = vrot.lane.b32.xlu0 %v427, 127
        %v712 = vpop.permute.xlu0 %711
        %713 = vrot.lane.b32.xlu0 %v429, 127
        %v714 = vpop.permute.xlu0 %713
        %715 = vrot.lane.b32.xlu0 %v431, 127
        %v716 = vpop.permute.xlu0 %715
        %vm717 = vcmp.lt.s32.totalorder %v469, 127
        %v718 = vsel %vm717, %v706, %v712
        %v719 = vsel %vm717, %v708, %v714
        %v720 = vsel %vm717, %v710, %v716
        %v721 = vsel %vm717, %v712, %v706
        %v722 = vsel %vm717, %v714, %v708
        %v723 = vsel %vm717, %v716, %v710
        %s724 = scalar_lea.vmem %s7, 5
        %v725 = vld [vmem:[%s724] ss:$8 sm:$0x3]
        %v727 = vlaneseq
        %v728 = vshrl.u32 %v727, 7
        %v729 = vsub.s32 0, %v728
        %v730 = vrot.slane %v725, %v729
        %v731 = vlaneseq
        %v732 = vshrl.u32 %v731, 7
        %v733 = vsub.s32 1, %v732
        %v734 = vrot.slane %v725, %v733
        %v737 = vmul.f32 %v718, %v730
        %v738 = vmul.f32 %v721, %v734
        %v739 = vmul.f32 %v719, %v730
        %v740 = vmul.f32 %v722, %v734
        %v741 = vmul.f32 %v720, %v730
        %v742 = vmul.f32 %v723, %v734
        %743 = vset.pattern.permute.xlu0 5
        %744 = vperm.xlu0 %743, %v432
        %v745 = vpop.permute.xlu0 %744
        %747 = vset.pattern.permute.xlu0 5
        %748 = vperm.xlu0 %747, %v433
        %v749 = vpop.permute.xlu0 %748
        %751 = vset.pattern.permute.xlu0 5
        %752 = vperm.xlu0 %751, %v434
        %v753 = vpop.permute.xlu0 %752
        %v755 = vmul.f32 %v737, %v745
        %v756 = vmul.f32 %v738, %v745
        %v757 = vmul.f32 %v739, %v749
        %v758 = vmul.f32 %v740, %v749
        %v759 = vmul.f32 %v741, %v753
        %v760 = vmul.f32 %v742, %v753
        %v761 = vadd.f32 %v699, %v755
        %v762 = vadd.f32 %v700, %v756
        %v763 = vadd.f32 %v701, %v757
        %v764 = vadd.f32 %v702, %v758
        %v765 = vadd.f32 %v703, %v759
        %v766 = vadd.f32 %v704, %v760
        %767 = vrot.lane.b32.xlu0 %v426, 113
        %v768 = vpop.permute.xlu0 %767
        %769 = vrot.lane.b32.xlu0 %v428, 113
        %v770 = vpop.permute.xlu0 %769
        %771 = vrot.lane.b32.xlu0 %v430, 113
        %v772 = vpop.permute.xlu0 %771
        %773 = vrot.lane.b32.xlu0 %v427, 113
        %v774 = vpop.permute.xlu0 %773
        %775 = vrot.lane.b32.xlu0 %v429, 113
        %v776 = vpop.permute.xlu0 %775
        %777 = vrot.lane.b32.xlu0 %v431, 113
        %v778 = vpop.permute.xlu0 %777
        %vm779 = vcmp.lt.s32.totalorder %v469, 113
        %v780 = vsel %vm779, %v768, %v774
        %v781 = vsel %vm779, %v770, %v776
        %v782 = vsel %vm779, %v772, %v778
        %v783 = vsel %vm779, %v774, %v768
        %v784 = vsel %vm779, %v776, %v770
        %v785 = vsel %vm779, %v778, %v772
        %s786 = scalar_lea.vmem %s7, 6
        %v787 = vld [vmem:[%s786] ss:$8 sm:$0x3]
        %v789 = vlaneseq
        %v790 = vshrl.u32 %v789, 7
        %v791 = vsub.s32 0, %v790
        %v792 = vrot.slane %v787, %v791
        %v793 = vlaneseq
        %v794 = vshrl.u32 %v793, 7
        %v795 = vsub.s32 1, %v794
        %v796 = vrot.slane %v787, %v795
        %v799 = vmul.f32 %v780, %v792
        %v800 = vmul.f32 %v783, %v796
        %v801 = vmul.f32 %v781, %v792
        %v802 = vmul.f32 %v784, %v796
        %v803 = vmul.f32 %v782, %v792
        %v804 = vmul.f32 %v785, %v796
        %805 = vset.pattern.permute.xlu0 6
        %806 = vperm.xlu0 %805, %v432
        %v807 = vpop.permute.xlu0 %806
        %809 = vset.pattern.permute.xlu0 6
        %810 = vperm.xlu0 %809, %v433
        %v811 = vpop.permute.xlu0 %810
        %813 = vset.pattern.permute.xlu0 6
        %814 = vperm.xlu0 %813, %v434
        %v815 = vpop.permute.xlu0 %814
        %v817 = vmul.f32 %v799, %v807
        %v818 = vmul.f32 %v800, %v807
        %v819 = vmul.f32 %v801, %v811
        %v820 = vmul.f32 %v802, %v811
        %v821 = vmul.f32 %v803, %v815
        %v822 = vmul.f32 %v804, %v815
        %v823 = vadd.f32 %v761, %v817
        %v824 = vadd.f32 %v762, %v818
        %v825 = vadd.f32 %v763, %v819
        %v826 = vadd.f32 %v764, %v820
        %v827 = vadd.f32 %v765, %v821
        %v828 = vadd.f32 %v766, %v822
        %829 = vrot.lane.b32.xlu0 %v426, 112
        %v830 = vpop.permute.xlu0 %829
        %831 = vrot.lane.b32.xlu0 %v428, 112
        %v832 = vpop.permute.xlu0 %831
        %833 = vrot.lane.b32.xlu0 %v430, 112
        %v834 = vpop.permute.xlu0 %833
        %835 = vrot.lane.b32.xlu0 %v427, 112
        %v836 = vpop.permute.xlu0 %835
        %837 = vrot.lane.b32.xlu0 %v429, 112
        %v838 = vpop.permute.xlu0 %837
        %839 = vrot.lane.b32.xlu0 %v431, 112
        %v840 = vpop.permute.xlu0 %839
        %vm841 = vcmp.lt.s32.totalorder %v469, 112
        %v842 = vsel %vm841, %v830, %v836
        %v843 = vsel %vm841, %v832, %v838
        %v844 = vsel %vm841, %v834, %v840
        %v845 = vsel %vm841, %v836, %v830
        %v846 = vsel %vm841, %v838, %v832
        %v847 = vsel %vm841, %v840, %v834
        %s848 = scalar_lea.vmem %s7, 7
        %v849 = vld [vmem:[%s848] ss:$8 sm:$0x3]
        %v851 = vlaneseq
        %v852 = vshrl.u32 %v851, 7
        %v853 = vsub.s32 0, %v852
        %v854 = vrot.slane %v849, %v853
        %v855 = vlaneseq
        %v856 = vshrl.u32 %v855, 7
        %v857 = vsub.s32 1, %v856
        %v858 = vrot.slane %v849, %v857
        %v861 = vmul.f32 %v842, %v854
        %v862 = vmul.f32 %v845, %v858
        %v863 = vmul.f32 %v843, %v854
        %v864 = vmul.f32 %v846, %v858
        %v865 = vmul.f32 %v844, %v854
        %v866 = vmul.f32 %v847, %v858
        %867 = vset.pattern.permute.xlu0 7
        %868 = vperm.xlu0 %867, %v432
        %v869 = vpop.permute.xlu0 %868
        %871 = vset.pattern.permute.xlu0 7
        %872 = vperm.xlu0 %871, %v433
        %v873 = vpop.permute.xlu0 %872
        %875 = vset.pattern.permute.xlu0 7
        %876 = vperm.xlu0 %875, %v434
        %v877 = vpop.permute.xlu0 %876
        %v879 = vmul.f32 %v861, %v869
        %v880 = vmul.f32 %v862, %v869
        %v881 = vmul.f32 %v863, %v873
        %v882 = vmul.f32 %v864, %v873
        %v883 = vmul.f32 %v865, %v877
        %v884 = vmul.f32 %v866, %v877
        %v885 = vadd.f32 %v823, %v879
        %v886 = vadd.f32 %v824, %v880
        %v887 = vadd.f32 %v825, %v881
        %v888 = vadd.f32 %v826, %v882
        %v889 = vadd.f32 %v827, %v883
        %v890 = vadd.f32 %v828, %v884
        %891 = vrot.lane.b32.xlu0 %v426, 111
        %v892 = vpop.permute.xlu0 %891
        %893 = vrot.lane.b32.xlu0 %v428, 111
        %v894 = vpop.permute.xlu0 %893
        %895 = vrot.lane.b32.xlu0 %v430, 111
        %v896 = vpop.permute.xlu0 %895
        %897 = vrot.lane.b32.xlu0 %v427, 111
        %v898 = vpop.permute.xlu0 %897
        %899 = vrot.lane.b32.xlu0 %v429, 111
        %v900 = vpop.permute.xlu0 %899
        %901 = vrot.lane.b32.xlu0 %v431, 111
        %v902 = vpop.permute.xlu0 %901
        %vm903 = vcmp.lt.s32.totalorder %v469, 111
        %v904 = vsel %vm903, %v892, %v898
        %v905 = vsel %vm903, %v894, %v900
        %v906 = vsel %vm903, %v896, %v902
        %v907 = vsel %vm903, %v898, %v892
        %v908 = vsel %vm903, %v900, %v894
        %v909 = vsel %vm903, %v902, %v896
        %s910 = scalar_lea.vmem %s7, 16
        %v911 = vld [vmem:[%s910] ss:$8 sm:$0x3]
        %v913 = vlaneseq
        %v914 = vshrl.u32 %v913, 7
        %v915 = vsub.s32 0, %v914
        %v916 = vrot.slane %v911, %v915
        %v917 = vlaneseq
        %v918 = vshrl.u32 %v917, 7
        %v919 = vsub.s32 1, %v918
        %v920 = vrot.slane %v911, %v919
        %v923 = vmul.f32 %v904, %v916
        %v924 = vmul.f32 %v907, %v920
        %v925 = vmul.f32 %v905, %v916
        %v926 = vmul.f32 %v908, %v920
        %v927 = vmul.f32 %v906, %v916
        %v928 = vmul.f32 %v909, %v920
        %929 = vset.pattern.permute.xlu0 8
        %930 = vperm.xlu0 %929, %v432
        %v931 = vpop.permute.xlu0 %930
        %933 = vset.pattern.permute.xlu0 8
        %934 = vperm.xlu0 %933, %v433
        %v935 = vpop.permute.xlu0 %934
        %937 = vset.pattern.permute.xlu0 8
        %938 = vperm.xlu0 %937, %v434
        %v939 = vpop.permute.xlu0 %938
        %v941 = vmul.f32 %v923, %v931
        %v942 = vmul.f32 %v924, %v931
        %v943 = vmul.f32 %v925, %v935
        %v944 = vmul.f32 %v926, %v935
        %v945 = vmul.f32 %v927, %v939
        %v946 = vmul.f32 %v928, %v939
        %v947 = vadd.f32 %v885, %v941
        %v948 = vadd.f32 %v886, %v942
        %v949 = vadd.f32 %v887, %v943
        %v950 = vadd.f32 %v888, %v944
        %v951 = vadd.f32 %v889, %v945
        %v952 = vadd.f32 %v890, %v946
        %v953 = vld [vmem:[%s4] sm:$0xff]
        %v954 = vld [vmem:[%s4 + $0x8] sm:$0xff]
        %v955 = vld [vmem:[%s4 + $0x10] sm:$0xff]
        %957 = vset.pattern.permute.xlu0 0
        %958 = vperm.xlu0 %957, %v953
        %v959 = vpop.permute.xlu0 %958
        %962 = vset.pattern.permute.xlu0 0
        %963 = vperm.xlu0 %962, %v954
        %v964 = vpop.permute.xlu0 %963
        %967 = vset.pattern.permute.xlu0 0
        %968 = vperm.xlu0 %967, %v955
        %v969 = vpop.permute.xlu0 %968
        %v971 = vadd.f32 %v947, %v959
        %v972 = vadd.f32 %v948, %v959
        %v973 = vadd.f32 %v949, %v964
        %v974 = vadd.f32 %v950, %v964
        %v975 = vadd.f32 %v951, %v969
        %v976 = vadd.f32 %v952, %v969
        %v977 = vmax.f32 %v971, 0.0
        %v978 = vmax.f32 %v972, 0.0
        %v979 = vmax.f32 %v973, 0.0
        %v980 = vmax.f32 %v974, 0.0
        %v981 = vmax.f32 %v975, 0.0
        %v982 = vmax.f32 %v976, 0.0
        %v983 = vmin.f32 %v977, 6.0
        %v984 = vmin.f32 %v978, 6.0
        %v985 = vmin.f32 %v979, 6.0
        %v986 = vmin.f32 %v980, 6.0
        %v987 = vmin.f32 %v981, 6.0
        %v988 = vmin.f32 %v982, 6.0
        %v989 = vld [vmem:[%s5] sm:$0xff]
        %v990 = vld [vmem:[%s6] sm:$0xff]
        %992 = vset.pattern.permute.xlu0 0
        %993 = vperm.xlu0 %992, %v990
        %v994 = vpop.permute.xlu0 %993
        %vm996 = vcmask 195584
        %v998 = vsel %vm996, %v989, 0
        %1000 = vmatprep.subr.mxu0 0.0
        %1001 = vmatpush1.msra.mxu0 0.0
        %1002 = vmatprep.subr.mxu0 0.0
        %1003 = vmatpush1.msra.mxu0 0.0
        %1004 = vmatprep.subr.mxu0 0.0
        %1005 = vmatpush1.msra.mxu0 0.0
        %1006 = vmatprep.subr.mxu0 0.0
        %1007 = vmatpush1.msra.mxu0 0.0
        %1008 = vmatprep.subr.mxu0 0.0
        %1009 = vmatpush1.msra.mxu0 0.0
        %1010 = vmatprep.subr.mxu0 0.0
        %1011 = vmatpush1.msra.mxu0 0.0
        %1012 = vmatprep.subr.mxu0 0.0
        %1013 = vmatpush1.msra.mxu0 0.0
        %1014 = vmatprep.subr.mxu0 0.0
        %1015 = vmatpush1.msra.mxu0 0.0
        %1016 = vmatprep.subr.mxu0 0.0
        %1017 = vmatpush1.msra.mxu0 0.0
        %1018 = vmatprep.subr.mxu0 0.0
        %1019 = vmatpush1.msra.mxu0 0.0
        %1020 = vmatprep.subr.mxu0 0.0
        %1021 = vmatpush1.msra.mxu0 0.0
        %1022 = vmatprep.subr.mxu0 0.0
        %1023 = vmatpush1.msra.mxu0 0.0
        %1024 = vmatprep.subr.mxu0 0.0
        %1025 = vmatpush1.msra.mxu0 0.0
        %1026 = vmatprep.subr.mxu0 %v988
        %1027 = vmatpush1.msra.mxu0 %v987
        %1028 = vmatprep.subr.mxu0 %v986
        %1029 = vmatpush1.msra.mxu0 %v985
        %1030 = vmatprep.subr.mxu0 %v984
        %1031 = vmatpush1.msra.mxu0 %v983
        %1032 = vmatprep.subr.mxu0 0.0
        %1033 = vmatpush2.msra.mxu0 0.0
        %1034 = vmatprep.subr.mxu0 0.0
        %1035 = vmatpush2.msra.mxu0 0.0
        %1036 = vmatprep.subr.mxu0 0.0
        %1037 = vmatpush2.msra.mxu0 0.0
        %1038 = vmatprep.subr.mxu0 0.0
        %1039 = vmatpush2.msra.mxu0 0.0
        %1040 = vmatprep.subr.mxu0 0.0
        %1041 = vmatpush2.msra.mxu0 0.0
        %1042 = vmatprep.subr.mxu0 0.0
        %1043 = vmatpush2.msra.mxu0 0.0
        %1044 = vmatprep.subr.mxu0 0.0
        %1045 = vmatpush2.msra.mxu0 0.0
        %1046 = vmatprep.subr.mxu0 0.0
        %1047 = vmatpush2.msra.mxu0 0.0
        %1048 = vmatprep.subr.mxu0 0.0
        %1049 = vmatpush2.msra.mxu0 0.0
        %1050 = vmatprep.subr.mxu0 0.0
        %1051 = vmatpush2.msra.mxu0 0.0
        %1052 = vmatprep.subr.mxu0 0.0
        %1053 = vmatpush2.msra.mxu0 0.0
        %1054 = vmatprep.subr.mxu0 0.0
        %1055 = vmatpush2.msra.mxu0 0.0
        %1056 = vmatprep.subr.mxu0 0.0
        %1057 = vmatpush2.msra.mxu0 0.0
        %1058 = vmatprep.subr.mxu0 0.0
        %1059 = vmatpush2.msra.mxu0 0.0
        %1060 = vmatprep.subr.mxu0 0.0
        %1061 = vmatpush2.msra.mxu0 0.0
        %1062 = vmatprep.subr.mxu0 0.0
        %1063 = vmatpush2.msra.mxu0 0.0
        %1064 = vmatprep.mubr.f32.mxu0 0.0
        %1065 = vmatmul.mubr.f32.gmra.mxu0 %v998
        %v1066 = vpop.f32.mrf.mxu0
        %v1067 = vadd.f32 %v994, %v1066
        %v1068 = vpop.f32.mrf.mxu0
        %v1069 = vadd.f32 %v994, %v1068
        %1070 = vdwg.mxu0
        %v1071 = vadd.f32 %v1067, %v304
        %v1072 = vadd.f32 %v1069, %v305
        %1073 = vst [vmem:[%s298] sm:$0xff] %v1071
        %1074 = vst [vmem:[%s298 + $0x8] sm:$0xff] %v1072
        %s1075 = sand.u32 %s203, 1
        %s1076 = scalar_lea.sflag [#allocation3], %s1075
        %s1077 = sand.u32 %s203, 1
        %s1078 = smul.addr %s1077, 16
        %s1079 = scalar_lea.vmem [#allocation2], %s1078
        // Predicated region
        $region53: #{tpu_custom_call.1} parent=51 // pred_check
          %p1080 = pneg %p213
        $region54: #{tpu_custom_call.1} parent=51 // pred_check_branch
          %1082 = sbr.rel (%p1080) target = $region56
        $region55: #{tpu_custom_call.1} parent=51 // pred_region
          %s1084 = ssub.s32 256, 256
          %1085 = vsyncadd %s1076, %s1084
          %s1086 = smul.addr %s22, 2
          %s1087 = smul.addr %s1086, 128
          %s1088 = scalar_lea.hbm %s8, %s1087
          %s1090 = sshll.u32 %s1079, 4
          %s1091 = int_to_ptr.vmem [resolvable:$true] %s1090
          %1093 = dma.vmem_to_hbm [thread:$0]  %s1091, 256, %s1088, %s1076
        $region56: #{tpu_custom_call.1} parent=51 // pred_fallthru
          _
      $region52: #{tpu_custom_call.1} parent=5 // pred_fallthru
        _
      %p1094 = scmp.le.s32.totalorder 2, %s17
      // Predicated region
      $region57: #{tpu_custom_call.1} parent=5 // pred_check
        %p1095 = pneg %p1094
      $region58: #{tpu_custom_call.1} parent=5 // pred_check_branch
        %1097 = sbr.rel (%p1095) target = $region60
      $region59: #{tpu_custom_call.1} parent=5 // pred_region
        %s1098 = ssub.s32 %s17, 2
        // Predicated region
        $region61: #{tpu_custom_call.1} parent=59 // pred_check
          %p1099 = pneg %p219
        $region62: #{tpu_custom_call.1} parent=59 // pred_check_branch
          %1101 = sbr.rel (%p1099) target = $region64
        $region63: #{tpu_custom_call.1} parent=59 // pred_region
          %s1102 = sand.u32 %s204, 1
          %s1103 = scalar_lea.sflag [#allocation3], %s1102
          %s1104 = sand.u32 %s204, 1
          %s1105 = smul.addr %s1104, 16
          %s1106 = scalar_lea.vmem [#allocation2], %s1105
          %1107 = dma.done %s1103, 256
        $region64: #{tpu_custom_call.1} parent=59 // pred_fallthru
          _
      $region60: #{tpu_custom_call.1} parent=5 // pred_fallthru
        _
    $region6: #{tpu_custom_call.1} parent=1 // loop_footer
      %s21 = sadd.s32 1, %s17
    $region7: #{tpu_custom_call.1} parent=1 // loop_footer_branch
      %16 = sbr.rel target = $region3
    $region8: #{tpu_custom_call.1} parent=1 // loop_exit
      _
    %1108 = vsyncpa [#allocation3], 1
    %s1109 = scalar_lea.sflag [#allocation3], 1
    %1110 = vsyncpa %s1109, 1

</llo_original>
